<compile_context>
chip_gen: v7x
topology: tpu7x:2x2x1
jax: 0.10.0
libtpu: 0.0.40
codegen_flags: <defaults>
</compile_context>

<pallas_src>
import jax
import jax.numpy as jnp
from jax import lax
from jax.experimental import pallas as pl
from jax.experimental.pallas import tpu as pltpu

LANE = 128
GROUP_ROWS = 256                 # rows folded per fori_loop iteration (32 f32 vregs/operand)
_PALLAS_MIN_ELEMS = 1 << 20      # ~1M elems: below this XLA's fused reduce is already optimal


def _round_up(x, m):
    return ((x + m - 1) // m) * m


def _default_block_rows():
    """1 MiB f32 input blocks by default; 2 MiB on v7x (step overhead dominates there)."""
    try:
        kind = jax.devices()[0].device_kind.lower()
    except Exception:
        return 2048
    return 4096 if ("v7" in kind or "tpu7" in kind) else 2048


def _make_partial_kernel(rows_total, block_rows, group_rows, scale):
    """Per-tile (8,128) partial of scale * [(gt-1)^2 + gen^2], masked to valid rows."""
    n_groups = block_rows // group_rows
    needs_mask = (rows_total % block_rows) != 0   # static: only boundary tiles need it

    def kernel(gt_ref, gen_ref, out_ref):
        tile = pl.program_id(0)
        # Valid rows in this tile (rows_total is a trace-time constant).
        rows_valid = jnp.minimum(rows_total - tile * block_rows, block_rows)
        if needs_mask:
            # Hoisted out of the loop: JAX does not CSE broadcast_iota per iteration.
            base_rows = lax.broadcasted_iota(jnp.int32, (group_rows, LANE), 0)

        def body(g, acc):
            r0 = pl.multiple_of(g * group_rows, group_rows)
            gt = gt_ref[pl.ds(r0, group_rows), :].astype(jnp.float32)   # upcast after DMA
            gen = gen_ref[pl.ds(r0, group_rows), :].astype(jnp.float32)
            d = gt - 1.0
            sq = d * d + gen * gen                                      # pure VALU
            if needs_mask:
                sq = jnp.where((r0 + base_rows) < rows_valid, sq, 0.0)
            # Fold the group's (8,128) sublane blocks with elementwise vreg adds (no XLU).
            return acc + jnp.sum(sq.reshape(-1, 8, LANE), axis=0)

        acc = lax.fori_loop(0, n_groups, body, jnp.zeros((8, LANE), jnp.float32),
                            unroll=True if n_groups <= 8 else 8)
        out_ref[...] = acc * jnp.float32(scale)   # per-pair 1/count applied in-kernel

    return kernel


def _pallas_segment_loss(gt2d, gen2d, scale, block_rows_max):
    """One fused pallas_call over a (rows, 128) segment; returns its scalar contribution."""
    rows = gt2d.shape[0]
    if rows >= block_rows_max:
        block_rows = block_rows_max              # multiple of 256 by construction
        group_rows = GROUP_ROWS
    else:
        # Single-tile segment: pick a group that is a multiple of 8 and divides the block.
        group_rows = min(GROUP_ROWS, _round_up(rows, 8))
        block_rows = _round_up(rows, group_rows)
    n_tiles = pl.cdiv(rows, block_rows)

    kernel = _make_partial_kernel(rows, block_rows, group_rows, float(scale))
    partials = pl.pallas_call(
        kernel,
        out_shape=jax.ShapeDtypeStruct((n_tiles * 8, LANE), jnp.float32),
        grid_spec=pltpu.PrefetchScalarGridSpec(
            num_scalar_prefetch=0,
            grid=(n_tiles,),
            in_specs=[
                # TODO(synk): if a v5e profile shows exposed DMA, add pipeline_mode=pl.Buffered(3).
                pl.BlockSpec((block_rows, LANE), lambda i: (i, 0)),
                pl.BlockSpec((block_rows, LANE), lambda i: (i, 0)),
            ],
            out_specs=pl.BlockSpec((8, LANE), lambda i: (i, 0)),
        ),
        compiler_params=pltpu.CompilerParams(
            # Tiles are independent.  TODO(synk): if a v7x profile shows one idle
            # TensorCore, switch to (pltpu.CORE_PARALLEL,).
            dimension_semantics=("parallel",),
        ),
    )(gt2d, gen2d)
    # Tiny finish: scale is already applied in-kernel.
    return jnp.sum(partials)


def _build_segments(gt_res, gen_res):
    """Return [(gt_flat, gen_flat, n_elems, n_pairs)] in the ORIGINAL dtype (no copies)."""
    if isinstance(gt_res, (list, tuple)):
        segs = []
        for gt, gen in zip(gt_res, gen_res):
            gt = jnp.asarray(gt)
            gen = jnp.asarray(gen)
            assert gt.shape == gen.shape
            segs.append((jnp.ravel(gt), jnp.ravel(gen), int(gt.size), 1))
        return segs
    # Stacked-tensor case: zip iterates the leading dim; every pair shares a
    # count, so sum_i mean_i == (1/per_pair_count) * sum(all elements).
    gt_res = jnp.asarray(gt_res)
    gen_res = jnp.asarray(gen_res)
    assert gt_res.shape == gen_res.shape
    n_pairs = int(gt_res.shape[0]) if gt_res.ndim > 0 else 0
    if n_pairs == 0:
        return []
    return [(jnp.ravel(gt_res), jnp.ravel(gen_res), int(gt_res.size), n_pairs)]


def discriminator_loss(gt_res, gen_res, *, min_pallas_elems=_PALLAS_MIN_ELEMS,
                       block_rows=None, **batch):
    """JAX/Pallas equivalent of DiscriminatorLoss.forward.

    gt_res / gen_res may be a list of arrays (multi-scale discriminator
    outputs) or a single stacked array, in which case iteration is over the
    leading dimension (matching Python zip over a torch.Tensor).
    """
    if block_rows is None:
        block_rows = _default_block_rows()
    assert block_rows % GROUP_ROWS == 0, "block_rows must be a multiple of 256"

    segments = _build_segments(gt_res, gen_res)
    loss = jnp.float32(0.0)
    for gt_flat, gen_flat, n, n_pairs in segments:
        per_pair = n // n_pairs
        if per_pair == 0:
            # torch.mean of an empty tensor is NaN; match that instead of crashing.
            loss = loss + jnp.float32(jnp.nan)
            continue
        scale = 1.0 / per_pair
        rows = n // LANE
        if n >= min_pallas_elems and (n % LANE == 0) and rows >= 8:
            loss = loss + _pallas_segment_loss(gt_flat.reshape(rows, LANE),
                                               gen_flat.reshape(rows, LANE),
                                               scale, block_rows)
        else:
            # XLA fast path: tiny or lane-unaligned segments (fused one-pass reduce).
            # TODO(synk): handle n % 128 != 0 segments in the Pallas path via a
            # 1-D lane mask instead of this fallback.
            gt = gt_flat.astype(jnp.float32)
            gen = gen_flat.astype(jnp.float32)
            loss = loss + scale * (jnp.sum((gt - 1.0) ** 2) + jnp.sum(gen * gen))
    return {"loss_disc": loss}


def _reference(gt_res, gen_res):
    if isinstance(gt_res, (list, tuple)):
        pairs = list(zip(gt_res, gen_res))
    else:
        pairs = [(gt_res[i], gen_res[i]) for i in range(gt_res.shape[0])]
    loss = jnp.float32(0.0)
    for gt, gen in pairs:
        loss = loss + jnp.mean((gt - 1.0) ** 2) + jnp.mean(gen ** 2)
    return loss


if __name__ == "__main__":
    key = jax.random.PRNGKey(0)
    k1, k2 = jax.random.split(key)
    # Discriminator outputs for ground-truth / generated samples:
    # (num_scales=2, channels=4, H=16, W=16); zip iterates the leading dim.
    gt_res = jax.random.normal(k1, (2, 4, 16, 16), dtype=jnp.float32)
    gen_res = jax.random.normal(k2, (2, 4, 16, 16), dtype=jnp.float32)
    ref = _reference(gt_res, gen_res)

    # 1) Default dispatch: tiny input -> fused-XLA fast path.
    out_small = discriminator_loss(gt_res, gen_res)
    loss_small = jax.block_until_ready(out_small["loss_disc"])
    assert jnp.allclose(loss_small, ref, rtol=1e-4, atol=1e-5), (loss_small, ref)

    # 2) Force the Pallas kernel path on the same inputs (single-tile case).
    out_pallas = discriminator_loss(gt_res, gen_res, min_pallas_elems=0)
    loss_pallas = jax.block_until_ready(out_pallas["loss_disc"])
    assert jnp.allclose(loss_pallas, ref, rtol=1e-4, atol=1e-5), (loss_pallas, ref)

    # 3) Multi-scale list form (different shapes per pair), one call per segment.
    k3, k4, k5, k6 = jax.random.split(key, 4)
    gt_list = [jax.random.normal(k3, (2, 4, 16, 16), dtype=jnp.float32),
               jax.random.normal(k4, (2, 8, 64), dtype=jnp.float32)]
    gen_list = [jax.random.normal(k5, (2, 4, 16, 16), dtype=jnp.float32),
                jax.random.normal(k6, (2, 8, 64), dtype=jnp.float32)]
    ref_list = _reference(gt_list, gen_list)
    out_list = discriminator_loss(gt_list, gen_list, min_pallas_elems=0)
    loss_list = jax.block_until_ready(out_list["loss_disc"])
    assert jnp.allclose(loss_list, ref_list, rtol=1e-4, atol=1e-5), (loss_list, ref_list)

    # 4) Multi-tile + in-kernel ragged-tail masking (forced small block size so
    #    the boundary-tile mask path is exercised on every chip generation).
    k7, k8 = jax.random.split(k3)
    gt_big = jax.random.normal(k7, (2, 1050, 128), dtype=jnp.float32)   # 2100 rows of 128
    gen_big = jax.random.normal(k8, (2, 1050, 128), dtype=jnp.float32)
    ref_big = _reference(gt_big, gen_big)
    out_big = discriminator_loss(gt_big, gen_big, min_pallas_elems=0, block_rows=512)
    loss_big = jax.block_until_ready(out_big["loss_disc"])
    assert jnp.allclose(loss_big, ref_big, rtol=1e-4, atol=1e-5), (loss_big, ref_big)

    print("KERNEL_OK")
</pallas_src>

<mosaic_0001>
module attributes {stable_mosaic.version = 11 : i64} {
  func.func @kernel(%arg0: i32, %arg1: memref<16x128xf32, #tpu.memory_space<vmem>>, %arg2: memref<16x128xf32, #tpu.memory_space<vmem>>, %arg3: memref<8x128xf32, #tpu.memory_space<vmem>>) attributes {dimension_semantics = [#tpu.dimension_semantics<parallel>], iteration_bounds = array<i64: 1>, scalar_prefetch = 0 : i64, scratch_operands = 0 : i64, tpu.core_type = #tpu.core_type<tc>, window_params = [{transform_indices = @transform_0, window_bounds = array<i64: 16, 128>}, {transform_indices = @transform_1, window_bounds = array<i64: 16, 128>}, {transform_indices = @transform_2, window_bounds = array<i64: 8, 128>}]} {
    %cst = arith.constant 0.000000e+00 : f32
    %0 = vector.broadcast %cst : f32 to vector<8x128xf32>
    %c0_i32 = arith.constant 0 : i32
    %c16_i32 = arith.constant 16 : i32
    %1 = arith.muli %c0_i32, %c16_i32 : i32
    %2 = tpu.assume_multiple %1, 16 : i32
    %3 = arith.index_cast %2 : i32 to index
    %c0 = arith.constant 0 : index
    %4 = vector.load %arg1[%3, %c0] : memref<16x128xf32, #tpu.memory_space<vmem>>, vector<16x128xf32>
    %5 = arith.index_cast %2 : i32 to index
    %c0_0 = arith.constant 0 : index
    %6 = vector.load %arg2[%5, %c0_0] : memref<16x128xf32, #tpu.memory_space<vmem>>, vector<16x128xf32>
    %cst_1 = arith.constant 1.000000e+00 : f32
    %7 = vector.broadcast %cst_1 : f32 to vector<16x128xf32>
    %8 = arith.subf %4, %7 : vector<16x128xf32>
    %9 = arith.mulf %8, %8 : vector<16x128xf32>
    %10 = arith.mulf %6, %6 : vector<16x128xf32>
    %11 = arith.addf %9, %10 : vector<16x128xf32>
    %12 = vector.shape_cast %11 : vector<16x128xf32> to vector<2x8x128xf32>
    %cst_2 = arith.constant dense<0.000000e+00> : vector<8x128xf32>
    %13 = vector.multi_reduction <add>, %12, %cst_2 [0] : vector<2x8x128xf32> to vector<8x128xf32>
    %14 = arith.addf %0, %13 : vector<8x128xf32>
    %c1_i32 = arith.constant 1 : i32
    %cst_3 = arith.constant 9.765625E-4 : f32
    %15 = vector.broadcast %cst_3 : f32 to vector<8x128xf32>
    %16 = arith.mulf %14, %15 : vector<8x128xf32>
    %c0_4 = arith.constant 0 : index
    %c0_5 = arith.constant 0 : index
    %17 = vector.load %arg3[%c0_4, %c0_5] : memref<8x128xf32, #tpu.memory_space<vmem>>, vector<8x128xf32>
    tpu.vector_store %arg3[%c0_4, %c0_5], %16 {strides = array<i32>} : memref<8x128xf32, #tpu.memory_space<vmem>>, vector<8x128xf32>,
    return
  }
  func.func @transform_0(%arg0: i32) -> (i32, i32) {
    %c0_i32 = arith.constant 0 : i32
    %c0_i32_0 = arith.constant 0 : i32
    return %arg0, %c0_i32 : i32, i32
  }
  func.func @transform_1(%arg0: i32) -> (i32, i32) {
    %c0_i32 = arith.constant 0 : i32
    %c0_i32_0 = arith.constant 0 : i32
    return %arg0, %c0_i32 : i32, i32
  }
  func.func @transform_2(%arg0: i32) -> (i32, i32) {
    %c0_i32 = arith.constant 0 : i32
    %c0_i32_0 = arith.constant 0 : i32
    return %arg0, %c0_i32 : i32, i32
  }
}

</mosaic_0001>

<llo_original>
// kernel: tpu_custom_call.1
$region0: #{tpu_custom_call.1}
  #allocation0 [shape = 'u32[]', space=smem, size = 0x4, offset = 0x4, fixed_abs, tag = 'smem constant byte address 0x4 - core index']
  #allocation1 [shape = 'u32[144,128]{1,0:T(1,128)}', space=vmem, size = 0x12000, scoped, tag = 'internal scratch']
  %s0 = inlined_call_operand.hbm [shape: f32[16,128], index: 0, kind: input, shape index: {}]
  %s1 = inlined_call_operand.hbm [shape: f32[16,128], index: 1, kind: input, shape index: {}]
  %s2 = inlined_call_operand.hbm [shape: f32[8,128], index: 2, kind: output, shape index: {}]
  %s3 = sld [smem:[#allocation0]]
  $region26: #{tpu_custom_call.1} parent=0
    _
  %s5 = ssub.s32 1, %s3
  %s6 = scalar_select 0, %s5, %s3
  $region1: #{tpu_custom_call.1} parent=0
    #allocation2 [shape = 'u8[8192]{0}', space=vmem, size = 0x2000, scoped, tag = 'input window, operand 0, single buffered']
    #allocation3 [shape = 's32[1]{0}', space=sflag, size = 0x4, scoped, tag = 'scoped memory for tpu_custom_call.1']
    #allocation4 [shape = 's32[1]{0}', space=sflag, size = 0x4, scoped, tag = 'scoped memory for tpu_custom_call.1']
    #allocation5 [shape = 'u8[8192]{0}', space=vmem, size = 0x2000, scoped, tag = 'input window, operand 1, single buffered']
    #allocation6 [shape = 's32[1]{0}', space=sflag, size = 0x4, scoped, tag = 'scoped memory for tpu_custom_call.1']
    #allocation7 [shape = 'u8[4096]{0}', space=vmem, size = 0x1000, scoped, tag = 'output window, operand 0, single buffered']
    %7 = vsyncpa [#allocation3], 0
    %8 = vsyncpa [#allocation6], 0
    %9 = vsyncpa [#allocation4], 0
    // Predicated region
    $region2: #{tpu_custom_call.1} parent=1 // pred_check
      _
    $region3: #{tpu_custom_call.1} parent=1 // pred_check_branch
      %11 = sbr.rel (0) target = $region5
    $region4: #{tpu_custom_call.1} parent=1 // pred_region
      %s13 = ssub.s32 256, 256
      %14 = vsyncadd [#allocation3], %s13
      %s15 = sshll.u32 [#allocation2], 4
      %s16 = int_to_ptr.vmem [resolvable:$true] %s15
      %21 = dma.hbm_to_vmem [thread:$0]  %s0, 256, %s16, [#allocation3], 128, 128, 8
    $region5: #{tpu_custom_call.1} parent=1 // pred_fallthru
      _
    // Predicated region
    $region6: #{tpu_custom_call.1} parent=1 // pred_check
      _
    $region7: #{tpu_custom_call.1} parent=1 // pred_check_branch
      %23 = sbr.rel (0) target = $region9
    $region8: #{tpu_custom_call.1} parent=1 // pred_region
      %s25 = ssub.s32 256, 256
      %26 = vsyncadd [#allocation6], %s25
      %s27 = sshll.u32 [#allocation5], 4
      %s28 = int_to_ptr.vmem [resolvable:$true] %s27
      %33 = dma.hbm_to_vmem [thread:$0]  %s1, 256, %s28, [#allocation6], 128, 128, 8
    $region9: #{tpu_custom_call.1} parent=1 // pred_fallthru
      _
    // Predicated region
    $region10: #{tpu_custom_call.1} parent=1 // pred_check
      _
    $region11: #{tpu_custom_call.1} parent=1 // pred_check_branch
      %35 = sbr.rel (0) target = $region13
    $region12: #{tpu_custom_call.1} parent=1 // pred_region
      %36 = dma.done [#allocation3], 256
    $region13: #{tpu_custom_call.1} parent=1 // pred_fallthru
      _
    // Predicated region
    $region14: #{tpu_custom_call.1} parent=1 // pred_check
      _
    $region15: #{tpu_custom_call.1} parent=1 // pred_check_branch
      %38 = sbr.rel (0) target = $region17
    $region16: #{tpu_custom_call.1} parent=1 // pred_region
      %39 = dma.done [#allocation6], 256
    $region17: #{tpu_custom_call.1} parent=1 // pred_fallthru
      _
    %v40 = vld [vmem:[#allocation2] sm:$0xff]
    %v41 = vld [vmem:[#allocation2 + $0x8] sm:$0xff]
    %v42 = vld [vmem:[#allocation5] sm:$0xff]
    %v43 = vld [vmem:[#allocation5 + $0x8] sm:$0xff]
    %v44 = vsub.f32 %v40, 1.0
    %v45 = vsub.f32 %v41, 1.0
    %v46 = vmul.f32 %v44, %v44
    %v47 = vmul.f32 %v45, %v45
    %v48 = vmul.f32 %v42, %v42
    %v49 = vmul.f32 %v43, %v43
    %v50 = vadd.f32 %v46, %v48
    %v51 = vadd.f32 %v47, %v49
    %v52 = vadd.f32 %v50, %v51
    %v53 = vadd.f32 %v52, 0.0
    %v54 = vmul.f32 %v53, 0.0009765625
    %55 = vst [vmem:[#allocation7] sm:$0xff] %v54
    // Predicated region
    $region18: #{tpu_custom_call.1} parent=1 // pred_check
      _
    $region19: #{tpu_custom_call.1} parent=1 // pred_check_branch
      %57 = sbr.rel (0) target = $region21
    $region20: #{tpu_custom_call.1} parent=1 // pred_region
      %s59 = ssub.s32 128, 128
      %60 = vsyncadd [#allocation4], %s59
      %s62 = sshll.u32 [#allocation7], 4
      %s63 = int_to_ptr.vmem [resolvable:$true] %s62
      %65 = dma.vmem_to_hbm [thread:$0]  %s63, 128, %s2, [#allocation4]
    $region21: #{tpu_custom_call.1} parent=1 // pred_fallthru
      _
    // Predicated region
    $region22: #{tpu_custom_call.1} parent=1 // pred_check
      _
    $region23: #{tpu_custom_call.1} parent=1 // pred_check_branch
      %67 = sbr.rel (0) target = $region25
    $region24: #{tpu_custom_call.1} parent=1 // pred_region
      %68 = dma.done [#allocation4], 128
    $region25: #{tpu_custom_call.1} parent=1 // pred_fallthru
      _
    %69 = vsyncpa [#allocation3], 1
    %70 = vsyncpa [#allocation6], 1
    %71 = vsyncpa [#allocation4], 1

</llo_original>
